<compile_context>
chip_gen: v5e
topology: v5e:2x2
jax: 0.10.0
libtpu: 0.0.40
codegen_flags: <defaults>
</compile_context>

<pallas_src>
import functools

import jax
import jax.numpy as jnp
from jax.experimental import pallas as pl
from jax.experimental.pallas import tpu as pltpu


def _round_up(v, m):
    return ((v + m - 1) // m) * m


def _default_row_tile():
    # Per-generation row tile: big tiles amortize the ~0.35us per-grid-step
    # overhead and give the MXU a large M dimension. v5e/v6e (128 MiB VMEM)
    # take 2048 rows; v7x (64 MiB VMEM) is capped at 1024.
    try:
        info = pltpu.get_tpu_info()
        vmem = int(getattr(info, "vmem_capacity_bytes", 0))
        if vmem > 64 * 1024 * 1024:
            return 2048
    except Exception:
        pass
    return 1024


def _wavenet_block_kernel(x_ref, xhist_ref, wd_ref, bd_ref, wrs_ref, brs_ref,
                          out_ref, skip_ref, *, tm, dilation, t_len, crp):
    i = pl.program_id(0)
    x = x_ref[...]                               # (tm, Crp) bf16, rows [i*tm, i*tm+tm)

    # Dilation-shifted rows xp[r] = x_flat[i*tm + r - dilation], stitched from
    # the tail of the previous row tile and the head of this one (no separate
    # HBM-resident shifted copy of the input).
    if dilation == 0:
        xp = x
    elif dilation == tm:
        xp = xhist_ref[...]
    else:
        xp = jnp.concatenate(
            [xhist_ref[tm - dilation:, :], x[:tm - dilation, :]], axis=0)
    if dilation > 0:
        # Zero rows whose time index t < dilation (causal left padding); this
        # also discards the garbage rows stitched in at grid step 0.
        row = jax.lax.broadcasted_iota(jnp.int32, (tm, 1), 0) + i * tm
        t = row % t_len
        xp = jnp.where(t >= dilation, xp, jnp.zeros_like(xp))

    # Fused dilated conv (kernel_size=2): one MXU matmul with K = 2*Crp.
    lhs = jnp.concatenate([xp, x], axis=-1)                       # (tm, 2*Crp) bf16
    conv = jnp.dot(lhs, wd_ref[...],
                   preferred_element_type=jnp.float32) + bd_ref[...]

    # Gated activation tanh(c)*sigmoid(c) via a single exp + approx reciprocal
    # (one EUP transcendental + one EUP rcp). Clamp keeps exp(-c) finite.
    c = jnp.clip(conv, -20.0, 20.0)
    u = jnp.exp(-c)
    u2 = u * u
    gated = (1.0 - u2) * pl.reciprocal((1.0 + u2) * (1.0 + u), approx=True)

    # Fused 1x1 convs: residual + skip projections in one MXU matmul.
    rs = jnp.dot(gated.astype(wrs_ref.dtype), wrs_ref[...],
                 preferred_element_type=jnp.float32) + brs_ref[...]
    res = rs[:, :crp]
    skip = rs[:, crp:]

    out_ref[...] = (x.astype(jnp.float32) + res).astype(out_ref.dtype)
    skip_ref[...] = skip.astype(skip_ref.dtype)


def wavenet_residual_block_nlc(x_btc, params, dilation, *, tm=None):
    """Channels-last entry point: x_btc is (B, T, residual_channels).

    Returns (output, skip) in the same channels-last layout so stacked blocks
    avoid per-block NCL<->NLC transposes (an extra HBM round trip per block).
    """
    B, T, Cr = x_btc.shape
    in_dtype = x_btc.dtype

    w_dil, b_dil = params["dilated_w"], params["dilated_b"]      # (Cd,Cr,2),(Cd,)
    w_res, b_res = params["res_w"], params["res_b"]              # (Cr,Cd,1),(Cr,)
    w_skip, b_skip = params["skip_w"], params["skip_b"]          # (Cs,Cd,1),(Cs,)
    Cd = w_dil.shape[0]
    Cs = w_skip.shape[0]

    # Lane-pad channels to multiples of 128 (dense stores, full MXU width).
    Crp, Cdp, Csp = (_round_up(c, 128) for c in (Cr, Cd, Cs))
    cdt = jnp.bfloat16  # MXU operand dtype; accumulation stays f32.

    def pad2(a, r, c):
        return jnp.pad(a, ((0, r - a.shape[0]), (0, c - a.shape[1])))

    # Conv1d weight (out, in, k): tap 0 pairs with x[t-d], tap 1 with x[t].
    w0 = pad2(jnp.transpose(w_dil[:, :, 0]), Crp, Cdp)
    w1 = pad2(jnp.transpose(w_dil[:, :, 1]), Crp, Cdp)
    wd = jnp.concatenate([w0, w1], axis=0).astype(cdt)           # (2*Crp, Cdp)
    bd = jnp.pad(b_dil, (0, Cdp - Cd)).reshape(1, Cdp).astype(jnp.float32)

    wres = pad2(jnp.transpose(w_res[:, :, 0]), Cdp, Crp)
    wskip = pad2(jnp.transpose(w_skip[:, :, 0]), Cdp, Csp)
    wrs = jnp.concatenate([wres, wskip], axis=1).astype(cdt)     # (Cdp, Crp+Csp)
    brs = jnp.concatenate(
        [jnp.pad(b_res, (0, Crp - Cr)), jnp.pad(b_skip, (0, Csp - Cs))]
    ).reshape(1, Crp + Csp).astype(jnp.float32)

    # Row tiling over flattened (B*T) rows.
    M = B * T
    tm_eff = tm if tm is not None else _default_row_tile()
    tm_eff = max(8, min(tm_eff, _round_up(M, 8)))
    tm_eff = (tm_eff // 8) * 8
    Mp = _round_up(M, tm_eff)
    if dilation > tm_eff:
        # TODO(synk): support dilation > row tile by fetching more history tiles.
        raise ValueError(f"dilation ({dilation}) must be <= row tile ({tm_eff})")

    x2 = jnp.pad(x_btc.reshape(M, Cr).astype(cdt),
                 ((0, Mp - M), (0, Crp - Cr)))                   # (Mp, Crp) bf16

    grid = (Mp // tm_eff,)
    kernel = functools.partial(_wavenet_block_kernel,
                               tm=tm_eff, dilation=dilation, t_len=T, crp=Crp)

    def row_spec(c):
        return pl.BlockSpec((tm_eff, c), lambda i: (i, 0))

    prev_spec = pl.BlockSpec((tm_eff, Crp), lambda i: (jnp.maximum(i - 1, 0), 0))

    def full_spec(r, c):
        return pl.BlockSpec((r, c), lambda i: (0, 0))

    out2, skip2 = pl.pallas_call(
        kernel,
        out_shape=(jax.ShapeDtypeStruct((Mp, Crp), in_dtype),
                   jax.ShapeDtypeStruct((Mp, Csp), in_dtype)),
        grid=grid,
        in_specs=[row_spec(Crp),                       # current row tile of x
                  prev_spec,                           # previous row tile (dilated-tap history)
                  full_spec(2 * Crp, Cdp), full_spec(1, Cdp),
                  full_spec(Cdp, Crp + Csp), full_spec(1, Crp + Csp)],
        out_specs=(row_spec(Crp), row_spec(Csp)),
        compiler_params=pltpu.CompilerParams(
            dimension_semantics=("parallel",),         # shards the row loop across v7x's 2 TCs
            vmem_limit_bytes=48 * 1024 * 1024),        # < v7x's 64 MiB, generous on v5e/v6e
    )(x2, x2, wd, bd, wrs, brs)

    out_btc = out2[:M, :Cr].reshape(B, T, Cr)
    skip_btc = skip2[:M, :Cs].reshape(B, T, Cs)
    return out_btc, skip_btc


def wavenet_residual_block(x_ncl, params, dilation, *, tm=None):
    """PyTorch-layout entry point: x_ncl is (B, residual_channels, T)."""
    out_btc, skip_btc = wavenet_residual_block_nlc(
        jnp.transpose(x_ncl, (0, 2, 1)), params, dilation, tm=tm)
    return (jnp.transpose(out_btc, (0, 2, 1)),
            jnp.transpose(skip_btc, (0, 2, 1)))


def _reference(x_ncl, params, dilation):
    """Pure-JAX f32 reference (same causal-trim convention)."""
    x = jnp.transpose(x_ncl, (0, 2, 1))
    T = x.shape[1]
    xprev = jnp.pad(x, ((0, 0), (dilation, 0), (0, 0)))[:, :T, :]
    conv = (xprev @ params["dilated_w"][:, :, 0].T
            + x @ params["dilated_w"][:, :, 1].T
            + params["dilated_b"])
    gated = jnp.tanh(conv) * jax.nn.sigmoid(conv)
    skip = gated @ params["skip_w"][:, :, 0].T + params["skip_b"]
    res = gated @ params["res_w"][:, :, 0].T + params["res_b"]
    out = x + res
    return jnp.transpose(out, (0, 2, 1)), jnp.transpose(skip, (0, 2, 1))


def _init_params(key, residual_channels, skip_channels, dilation_channels):
    ks = jax.random.split(key, 6)

    def init(k, shape, fan_in):
        return jax.random.normal(k, shape, jnp.float32) / jnp.sqrt(fan_in)

    return {
        "dilated_w": init(ks[0], (dilation_channels, residual_channels, 2),
                          residual_channels * 2),
        "dilated_b": init(ks[1], (dilation_channels,), residual_channels * 2),
        "res_w": init(ks[2], (residual_channels, dilation_channels, 1),
                      dilation_channels),
        "res_b": init(ks[3], (residual_channels,), dilation_channels),
        "skip_w": init(ks[4], (skip_channels, dilation_channels, 1),
                       dilation_channels),
        "skip_b": init(ks[5], (skip_channels,), dilation_channels),
    }


if __name__ == "__main__":
    B, T = 2, 16
    residual_channels, skip_channels, dilation_channels = 8, 32, 16
    dilation = 2

    key = jax.random.PRNGKey(0)
    k_x, k_p = jax.random.split(key)
    x = jax.random.normal(k_x, (B, residual_channels, T), jnp.float32)
    params = _init_params(k_p, residual_channels, skip_channels, dilation_channels)

    out, skip = jax.jit(
        lambda x: wavenet_residual_block(x, params, dilation)
    )(x)
    out = jax.block_until_ready(out)
    skip = jax.block_until_ready(skip)

    ref_out, ref_skip = _reference(x, params, dilation)
    assert out.shape == (B, residual_channels, T)
    assert skip.shape == (B, skip_channels, T)
    # bf16 MXU operands (f32 accumulation) -> small drift vs the f32 reference.
    assert jnp.allclose(out, ref_out, atol=5e-2, rtol=5e-2)
    assert jnp.allclose(skip, ref_skip, atol=5e-2, rtol=5e-2)

    print("KERNEL_OK")
</pallas_src>

<mosaic_0001>
module attributes {stable_mosaic.version = 11 : i64} {
  func.func @_wavenet_block_kernel(%arg0: i32, %arg1: memref<32x128xbf16, #tpu.memory_space<vmem>>, %arg2: memref<32x128xbf16, #tpu.memory_space<vmem>>, %arg3: memref<256x128xbf16, #tpu.memory_space<vmem>>, %arg4: memref<1x128xf32, #tpu.memory_space<vmem>>, %arg5: memref<128x256xbf16, #tpu.memory_space<vmem>>, %arg6: memref<1x256xf32, #tpu.memory_space<vmem>>, %arg7: memref<32x128xf32, #tpu.memory_space<vmem>>, %arg8: memref<32x128xf32, #tpu.memory_space<vmem>>) attributes {dimension_semantics = [#tpu.dimension_semantics<parallel>], iteration_bounds = array<i64: 1>, scalar_prefetch = 0 : i64, scratch_operands = 0 : i64, tpu.core_type = #tpu.core_type<tc>, window_params = [{transform_indices = @transform_0, window_bounds = array<i64: 32, 128>}, {transform_indices = @transform_1, window_bounds = array<i64: 32, 128>}, {pipeline_mode = #tpu.pipeline_mode<synchronous>, transform_indices = @transform_2, window_bounds = array<i64: 256, 128>}, {pipeline_mode = #tpu.pipeline_mode<synchronous>, transform_indices = @transform_3, window_bounds = array<i64: 1, 128>}, {pipeline_mode = #tpu.pipeline_mode<synchronous>, transform_indices = @transform_4, window_bounds = array<i64: 128, 256>}, {pipeline_mode = #tpu.pipeline_mode<synchronous>, transform_indices = @transform_5, window_bounds = array<i64: 1, 256>}, {transform_indices = @transform_6, window_bounds = array<i64: 32, 128>}, {transform_indices = @transform_7, window_bounds = array<i64: 32, 128>}]} {
    %c0 = arith.constant 0 : index
    %c0_0 = arith.constant 0 : index
    %0 = vector.load %arg1[%c0, %c0_0] : memref<32x128xbf16, #tpu.memory_space<vmem>>, vector<32x128xbf16>
    %c30 = arith.constant 30 : index
    %c0_1 = arith.constant 0 : index
    %1 = vector.load %arg2[%c30, %c0_1] : memref<32x128xbf16, #tpu.memory_space<vmem>>, vector<2x128xbf16>
    %2 = vector.extract_strided_slice %0 {offsets = [0, 0], sizes = [30, 128], strides = [1, 1]} : vector<32x128xbf16> to vector<30x128xbf16>
    %3 = tpu.concatenate %1, %2 in 0 : vector<2x128xbf16>, vector<30x128xbf16> -> vector<32x128xbf16>
    %4 = tpu.iota {dimensions = array<i32: 0>} : vector<32x1xi32>
    %c32_i32 = arith.constant 32 : i32
    %5 = arith.muli %arg0, %c32_i32 : i32
    %6 = vector.broadcast %5 : i32 to vector<32x1xi32>
    %7 = arith.addi %4, %6 : vector<32x1xi32>
    %c16_i32 = arith.constant 16 : i32
    %c0_i32 = arith.constant 0 : i32
    %8 = arith.cmpi eq, %c16_i32, %c0_i32 : i32
    %c1_i32 = arith.constant 1 : i32
    %9 = arith.select %8, %c1_i32, %c16_i32 : i32
    %10 = vector.broadcast %9 : i32 to vector<32x1xi32>
    %11 = arith.remsi %7, %10 : vector<32x1xi32>
    %c0_i32_2 = arith.constant 0 : i32
    %12 = vector.broadcast %c0_i32_2 : i32 to vector<32x1xi32>
    %13 = arith.cmpi ne, %11, %12 : vector<32x1xi32>
    %c0_i32_3 = arith.constant 0 : i32
    %14 = vector.broadcast %c0_i32_3 : i32 to vector<32x1xi32>
    %15 = arith.cmpi slt, %11, %14 : vector<32x1xi32>
    %c0_i32_4 = arith.constant 0 : i32
    %16 = arith.cmpi slt, %9, %c0_i32_4 : i32
    %17 = vector.broadcast %16 : i1 to vector<32x1xi1>
    %18 = vector.broadcast %17 : vector<32x1xi1> to vector<32x1xi1>
    %19 = arith.xori %15, %18 : vector<32x1xi1>
    %20 = arith.andi %19, %13 : vector<32x1xi1>
    %21 = vector.broadcast %9 : i32 to vector<32x1xi32>
    %22 = arith.addi %11, %21 : vector<32x1xi32>
    %23 = arith.select %20, %22, %11 : vector<32x1xi1>, vector<32x1xi32>
    %c2_i32 = arith.constant 2 : i32
    %24 = vector.broadcast %c2_i32 : i32 to vector<32x1xi32>
    %25 = arith.cmpi sge, %23, %24 : vector<32x1xi32>
    %cst = arith.constant 0.000000e+00 : bf16
    %26 = vector.broadcast %cst : bf16 to vector<32x128xbf16>
    %27 = vector.shape_cast %25 : vector<32x1xi1> to vector<32x1xi1>
    %28 = vector.broadcast %27 : vector<32x1xi1> to vector<32x128xi1>
    %29 = arith.select %28, %3, %26 : vector<32x128xi1>, vector<32x128xbf16>
    %30 = tpu.concatenate %29, %0 in 1 : vector<32x128xbf16>, vector<32x128xbf16> -> vector<32x256xbf16>
    %c0_5 = arith.constant 0 : index
    %c0_6 = arith.constant 0 : index
    %31 = vector.load %arg3[%c0_5, %c0_6] : memref<256x128xbf16, #tpu.memory_space<vmem>>, vector<256x128xbf16>
    %cst_7 = arith.constant dense<0.000000e+00> : vector<32x128xf32>
    %32 = tpu.matmul %30, %31, %cst_7 {dimension_numbers = #tpu.dot_dimension_numbers<[1], [0], [0], [1], [0, 0, 1, 1], [], []>} : vector<32x256xbf16>, vector<256x128xbf16>, vector<32x128xf32> -> vector<32x128xf32>
    %c0_8 = arith.constant 0 : index
    %c0_9 = arith.constant 0 : index
    %33 = vector.load %arg4[%c0_8, %c0_9] : memref<1x128xf32, #tpu.memory_space<vmem>>, vector<1x128xf32>
    %34 = vector.broadcast %33 : vector<1x128xf32> to vector<32x128xf32>
    %35 = arith.addf %32, %34 : vector<32x128xf32>
    %cst_10 = arith.constant -2.000000e+01 : f32
    %cst_11 = arith.constant 2.000000e+01 : f32
    %36 = vector.broadcast %cst_10 : f32 to vector<32x128xf32>
    %37 = arith.maximumf %36, %35 : vector<32x128xf32>
    %38 = vector.broadcast %cst_11 : f32 to vector<32x128xf32>
    %39 = arith.minimumf %38, %37 : vector<32x128xf32>
    %cst_12 = arith.constant 0.000000e+00 : f32
    %40 = vector.broadcast %cst_12 : f32 to vector<32x128xf32>
    %41 = arith.subf %40, %39 : vector<32x128xf32>
    %42 = math.exp %41 : vector<32x128xf32>
    %43 = arith.mulf %42, %42 : vector<32x128xf32>
    %cst_13 = arith.constant 1.000000e+00 : f32
    %44 = vector.broadcast %cst_13 : f32 to vector<32x128xf32>
    %45 = arith.subf %44, %43 : vector<32x128xf32>
    %cst_14 = arith.constant 1.000000e+00 : f32
    %46 = vector.broadcast %cst_14 : f32 to vector<32x128xf32>
    %47 = arith.addf %46, %43 : vector<32x128xf32>
    %cst_15 = arith.constant 1.000000e+00 : f32
    %48 = vector.broadcast %cst_15 : f32 to vector<32x128xf32>
    %49 = arith.addf %48, %42 : vector<32x128xf32>
    %50 = arith.mulf %47, %49 : vector<32x128xf32>
    %51 = tpu.reciprocal %50 {approx = true} : vector<32x128xf32> -> vector<32x128xf32>
    %52 = arith.mulf %45, %51 : vector<32x128xf32>
    %53 = arith.truncf %52 : vector<32x128xf32> to vector<32x128xbf16>
    %c0_16 = arith.constant 0 : index
    %c0_17 = arith.constant 0 : index
    %54 = vector.load %arg5[%c0_16, %c0_17] : memref<128x256xbf16, #tpu.memory_space<vmem>>, vector<128x256xbf16>
    %cst_18 = arith.constant dense<0.000000e+00> : vector<32x256xf32>
    %55 = tpu.matmul %53, %54, %cst_18 {dimension_numbers = #tpu.dot_dimension_numbers<[1], [0], [0], [1], [0, 0, 1, 1], [], []>} : vector<32x128xbf16>, vector<128x256xbf16>, vector<32x256xf32> -> vector<32x256xf32>
    %c0_19 = arith.constant 0 : index
    %c0_20 = arith.constant 0 : index
    %56 = vector.load %arg6[%c0_19, %c0_20] : memref<1x256xf32, #tpu.memory_space<vmem>>, vector<1x256xf32>
    %57 = vector.broadcast %56 : vector<1x256xf32> to vector<32x256xf32>
    %58 = arith.addf %55, %57 : vector<32x256xf32>
    %59 = vector.extract_strided_slice %58 {offsets = [0, 0], sizes = [32, 128], strides = [1, 1]} : vector<32x256xf32> to vector<32x128xf32>
    %60 = vector.extract_strided_slice %58 {offsets = [0, 128], sizes = [32, 128], strides = [1, 1]} : vector<32x256xf32> to vector<32x128xf32>
    %61 = arith.extf %0 : vector<32x128xbf16> to vector<32x128xf32>
    %62 = arith.addf %61, %59 : vector<32x128xf32>
    %c0_21 = arith.constant 0 : index
    %c0_22 = arith.constant 0 : index
    %63 = vector.load %arg7[%c0_21, %c0_22] : memref<32x128xf32, #tpu.memory_space<vmem>>, vector<32x128xf32>
    tpu.vector_store %arg7[%c0_21, %c0_22], %62 {strides = array<i32>} : memref<32x128xf32, #tpu.memory_space<vmem>>, vector<32x128xf32>,
    %c0_23 = arith.constant 0 : index
    %c0_24 = arith.constant 0 : index
    %64 = vector.load %arg8[%c0_23, %c0_24] : memref<32x128xf32, #tpu.memory_space<vmem>>, vector<32x128xf32>
    tpu.vector_store %arg8[%c0_23, %c0_24], %60 {strides = array<i32>} : memref<32x128xf32, #tpu.memory_space<vmem>>, vector<32x128xf32>,
    return
  }
  func.func @transform_0(%arg0: i32) -> (i32, i32) {
    %c0_i32 = arith.constant 0 : i32
    %c0_i32_0 = arith.constant 0 : i32
    return %arg0, %c0_i32 : i32, i32
  }
  func.func @transform_1(%arg0: i32) -> (i32, i32) {
    %c1_i32 = arith.constant 1 : i32
    %0 = arith.subi %arg0, %c1_i32 : i32
    %c0_i32 = arith.constant 0 : i32
    %1 = arith.maxsi %0, %c0_i32 : i32
    %c0_i32_0 = arith.constant 0 : i32
    %c0_i32_1 = arith.constant 0 : i32
    return %1, %c0_i32_0 : i32, i32
  }
  func.func @transform_2(%arg0: i32) -> (i32, i32) {
    %c0_i32 = arith.constant 0 : i32
    %c0_i32_0 = arith.constant 0 : i32
    %c0_i32_1 = arith.constant 0 : i32
    return %c0_i32, %c0_i32_0 : i32, i32
  }
  func.func @transform_3(%arg0: i32) -> (i32, i32) {
    %c0_i32 = arith.constant 0 : i32
    %c0_i32_0 = arith.constant 0 : i32
    %c0_i32_1 = arith.constant 0 : i32
    return %c0_i32, %c0_i32_0 : i32, i32
  }
  func.func @transform_4(%arg0: i32) -> (i32, i32) {
    %c0_i32 = arith.constant 0 : i32
    %c0_i32_0 = arith.constant 0 : i32
    %c0_i32_1 = arith.constant 0 : i32
    return %c0_i32, %c0_i32_0 : i32, i32
  }
  func.func @transform_5(%arg0: i32) -> (i32, i32) {
    %c0_i32 = arith.constant 0 : i32
    %c0_i32_0 = arith.constant 0 : i32
    %c0_i32_1 = arith.constant 0 : i32
    return %c0_i32, %c0_i32_0 : i32, i32
  }
  func.func @transform_6(%arg0: i32) -> (i32, i32) {
    %c0_i32 = arith.constant 0 : i32
    %c0_i32_0 = arith.constant 0 : i32
    return %arg0, %c0_i32 : i32, i32
  }
  func.func @transform_7(%arg0: i32) -> (i32, i32) {
    %c0_i32 = arith.constant 0 : i32
    %c0_i32_0 = arith.constant 0 : i32
    return %arg0, %c0_i32 : i32, i32
  }
}

</mosaic_0001>

<llo_original>
// kernel: _lambda_.1
$region0: #{_lambda_.1}
  #allocation0 [shape = 'u32[]', space=smem, size = 0x4, offset = 0x4, fixed_abs, tag = 'smem constant byte address 0x4 - core index']
  #allocation1 [shape = 'u32[72,128]{1,0:T(1,128)}', space=vmem, size = 0x9000, scoped, tag = 'internal scratch']
  %s0 = inlined_call_operand.vmem [shape: bf16[32,128], index: 0, kind: input, shape index: {}, may-alias: {0,1}]
  %s1 = inlined_call_operand.vmem [shape: bf16[32,128], index: 1, kind: input, shape index: {}, may-alias: {0,1}]
  %s2 = inlined_call_operand.hbm [shape: bf16[256,128], index: 2, kind: input, shape index: {}]
  %s3 = inlined_call_operand.vmem [shape: f32[1,128], index: 3, kind: input, shape index: {}]
  %s4 = inlined_call_operand.hbm [shape: bf16[128,256], index: 4, kind: input, shape index: {}]
  %s5 = inlined_call_operand.vmem [shape: f32[1,256], index: 5, kind: input, shape index: {}]
  %s6 = inlined_call_operand.vmem [shape: f32[32,128], index: 6, kind: output, shape index: {0}]
  %s7 = inlined_call_operand.hbm [shape: f32[32,128], index: 7, kind: output, shape index: {1}]
  %8 = xla_tuple %s6, %s7
  %s9 = sld [smem:[#allocation0]]
  $region50: #{_lambda_.1} parent=0
    _
  %s11 = ssub.s32 1, %s9
  %s12 = scalar_select 0, %s11, %s9
  $region1: #{_lambda_.1} parent=0
    #allocation2 [shape = 'u8[65536]{0}', space=vmem, size = 0x10000, scoped, tag = 'input window, operand 2, single buffered']
    #allocation3 [shape = 's32[1]{0}', space=sflag, size = 0x4, scoped, tag = 'scoped memory for _lambda_.1']
    #allocation4 [shape = 's32[1]{0}', space=sflag, size = 0x4, scoped, tag = 'scoped memory for _lambda_.1']
    #allocation5 [shape = 'u8[65536]{0}', space=vmem, size = 0x10000, scoped, tag = 'input window, operand 4, single buffered']
    #allocation6 [shape = 's32[1]{0}', space=sflag, size = 0x4, scoped, tag = 'scoped memory for _lambda_.1']
    #allocation7 [shape = 'u8[16384]{0}', space=vmem, size = 0x4000, scoped, tag = 'output window, operand 1, single buffered']
    %13 = vsyncpa [#allocation3], 0
    %14 = vsyncpa [#allocation6], 0
    %15 = vsyncpa [#allocation4], 0
    // Predicated region
    $region2: #{_lambda_.1} parent=1 // pred_check
      _
    $region3: #{_lambda_.1} parent=1 // pred_check_branch
      %17 = sbr.rel (0) target = $region5
    $region4: #{_lambda_.1} parent=1 // pred_region
      _
    $region5: #{_lambda_.1} parent=1 // pred_fallthru
      _
    // Predicated region
    $region6: #{_lambda_.1} parent=1 // pred_check
      _
    $region7: #{_lambda_.1} parent=1 // pred_check_branch
      %19 = sbr.rel (0) target = $region9
    $region8: #{_lambda_.1} parent=1 // pred_region
      %s20 = ssub.s32 0, 1
      %p21 = scmp.gt.s32.totalorder %s20, 0
      %s22 = scalar_select %p21, %s20, 0
      %s23 = smul.u32 4, %s22
      %p24 = scmp.lt.s32.totalorder %s23, 3
      %s25 = scalar_select %p24, %s23, 3
      %s26 = smul.addr %s25, 4
      %s27 = scalar_lea.vmem %s1, %s26
      %s28 = ssub.s32 0, 1
      %p29 = scmp.gt.s32.totalorder %s28, 0
      %s30 = scalar_select %p29, %s28, 0
      %s31 = smul.u32 4, %s30
    $region9: #{_lambda_.1} parent=1 // pred_fallthru
      _
    // Predicated region
    $region10: #{_lambda_.1} parent=1 // pred_check
      _
    $region11: #{_lambda_.1} parent=1 // pred_check_branch
      %33 = sbr.rel (0) target = $region13
    $region12: #{_lambda_.1} parent=1 // pred_region
      %35 = vsyncadd [#allocation3], 0
      %s36 = sshll.u32 %s2, 4
      %s37 = int_to_ptr.hbm [resolvable:$true] %s36
      %s38 = sshll.u32 [#allocation2], 4
      %s39 = int_to_ptr.vmem [resolvable:$true] %s38
      %44 = dma.hbm_to_vmem [thread:$0]  %s37, 2048, %s39, [#allocation3], 64, 64, 4
    $region13: #{_lambda_.1} parent=1 // pred_fallthru
      _
    // Predicated region
    $region14: #{_lambda_.1} parent=1 // pred_check
      _
    $region15: #{_lambda_.1} parent=1 // pred_check_branch
      %46 = sbr.rel (0) target = $region17
    $region16: #{_lambda_.1} parent=1 // pred_region
      _
    $region17: #{_lambda_.1} parent=1 // pred_fallthru
      _
    // Predicated region
    $region18: #{_lambda_.1} parent=1 // pred_check
      _
    $region19: #{_lambda_.1} parent=1 // pred_check_branch
      %48 = sbr.rel (0) target = $region21
    $region20: #{_lambda_.1} parent=1 // pred_region
      %50 = vsyncadd [#allocation6], 0
      %s51 = sshll.u32 %s4, 4
      %s52 = int_to_ptr.hbm [resolvable:$true] %s51
      %s53 = sshll.u32 [#allocation5], 4
      %s54 = int_to_ptr.vmem [resolvable:$true] %s53
      %59 = dma.hbm_to_vmem [thread:$0]  %s52, 2048, %s54, [#allocation6], 128, 128, 8
    $region21: #{_lambda_.1} parent=1 // pred_fallthru
      _
    // Predicated region
    $region22: #{_lambda_.1} parent=1 // pred_check
      _
    $region23: #{_lambda_.1} parent=1 // pred_check_branch
      %61 = sbr.rel (0) target = $region25
    $region24: #{_lambda_.1} parent=1 // pred_region
      _
    $region25: #{_lambda_.1} parent=1 // pred_fallthru
      _
    // Predicated region
    $region26: #{_lambda_.1} parent=1 // pred_check
      _
    $region27: #{_lambda_.1} parent=1 // pred_check_branch
      %63 = sbr.rel (0) target = $region29
    $region28: #{_lambda_.1} parent=1 // pred_region
      %65 = dma.done [#allocation3], 2048
    $region29: #{_lambda_.1} parent=1 // pred_fallthru
      _
    // Predicated region
    $region30: #{_lambda_.1} parent=1 // pred_check
      _
    $region31: #{_lambda_.1} parent=1 // pred_check_branch
      %67 = sbr.rel (0) target = $region33
    $region32: #{_lambda_.1} parent=1 // pred_region
      %69 = dma.done [#allocation6], 2048
    $region33: #{_lambda_.1} parent=1 // pred_fallthru
      _
    %s70 = ssub.s32 0, 1
    %p71 = scmp.gt.s32.totalorder %s70, 0
    %s72 = scalar_select %p71, %s70, 0
    %s73 = smul.u32 4, %s72
    %p74 = scmp.lt.s32.totalorder %s73, 3
    %s75 = scalar_select %p74, %s73, 3
    %s76 = smul.addr %s75, 4
    %s77 = scalar_lea.vmem %s1, %s76
    %s78 = ssub.s32 0, 1
    %p79 = scmp.gt.s32.totalorder %s78, 0
    %s80 = scalar_select %p79, %s78, 0
    %s81 = smul.u32 4, %s80
    %p82 = scmp.lt.s32.totalorder %s81, 3
    %s83 = scalar_select %p82, %s81, 3
    %s84 = smul.addr %s83, 4
    %s85 = scalar_lea.vmem %s1, %s84
    %s86 = ssub.s32 0, 1
    %p87 = scmp.gt.s32.totalorder %s86, 0
    %s88 = scalar_select %p87, %s86, 0
    %s89 = smul.u32 4, %s88
    %v93 = vld [vmem:[%s0] sm:$0xf]
    %v94 = vld [vmem:[%s0 + $0x4] sm:$0xf]
    %v95 = vld [vmem:[%s0 + $0x8] sm:$0xf]
    %v96 = vld [vmem:[%s0 + $0xc] sm:$0xf]
    %v97 = vld [vmem:[%s85 + $0xc] sm:$0x8]
    %v99 = vunpack.c.l.b16 %v97
    %v100 = vpack.c.b16 %v99, %v99
    %v101 = vrot.slane %v100, 3
    %v106 = vunpack.c.l.b16 %v93
    %v107 = vunpack.c.l.b16 %v94
    %v108 = vunpack.c.l.b16 %v95
    %v109 = vunpack.c.l.b16 %v96
    %v110 = vpack.c.b16 %v107, %v106
    %v111 = vpack.c.b16 %v109, %v108
    %vm112 = vcmask 1040384
    %v113 = vrot.slane %v110, 7
    %v114 = vrot.slane %v111, 7
    %v115 = vsel %vm112, %v113, %v114
    %vm117 = vcmask 1040384
    %v120 = vsel %vm117, %v101, %v113
    %v122 = vlaneseq
    %v123 = vshrl.u32 %v122, 7
    %v124 = vadd.s32 %v123, 8
    %v125 = vadd.s32 %v123, 16
    %v126 = vadd.s32 %v123, 24
    %s127 = smul.u32 0, 32
    %v128 = vstv %s127
    %v129 = vadd.s32 %v123, %v128
    %v130 = vadd.s32 %v124, %v128
    %v131 = vadd.s32 %v125, %v128
    %v132 = vadd.s32 %v126, %v128
    %vm133 = vcmp.lt.s32.totalorder %v129, 0
    %v134 = vsub.s32 0, %v129
    %v135 = vsel %vm133, %v134, %v129
    %v136 = vshrl.u32 %v135, 4
    %v137 = vand.u32 %v135, 15
    %v138 = vsub.s32 0, %v137
    %v139 = vsel %vm133, %v138, %v137
    %vm140 = vcmp.lt.s32.totalorder %v130, 0
    %v141 = vsub.s32 0, %v130
    %v142 = vsel %vm140, %v141, %v130
    %v143 = vshrl.u32 %v142, 4
    %v144 = vand.u32 %v142, 15
    %v145 = vsub.s32 0, %v144
    %v146 = vsel %vm140, %v145, %v144
    %vm147 = vcmp.lt.s32.totalorder %v131, 0
    %v148 = vsub.s32 0, %v131
    %v149 = vsel %vm147, %v148, %v131
    %v150 = vshrl.u32 %v149, 4
    %v151 = vand.u32 %v149, 15
    %v152 = vsub.s32 0, %v151
    %v153 = vsel %vm147, %v152, %v151
    %vm154 = vcmp.lt.s32.totalorder %v132, 0
    %v155 = vsub.s32 0, %v132
    %v156 = vsel %vm154, %v155, %v132
    %v157 = vshrl.u32 %v156, 4
    %v158 = vand.u32 %v156, 15
    %v159 = vsub.s32 0, %v158
    %v160 = vsel %vm154, %v159, %v158
    %vm161 = vcmp.ne.s32.totalorder %v139, 0
    %vm162 = vcmp.ne.s32.totalorder %v146, 0
    %vm163 = vcmp.ne.s32.totalorder %v153, 0
    %vm164 = vcmp.ne.s32.totalorder %v160, 0
    %vm165 = vcmp.lt.s32.totalorder %v139, 0
    %vm166 = vcmp.lt.s32.totalorder %v146, 0
    %vm167 = vcmp.lt.s32.totalorder %v153, 0
    %vm168 = vcmp.lt.s32.totalorder %v160, 0
    %vm169 = vmand %vm165, %vm161
    %vm170 = vmand %vm166, %vm162
    %vm171 = vmand %vm167, %vm163
    %vm172 = vmand %vm168, %vm164
    %v173 = vadd.s32 %v139, 16
    %v174 = vadd.s32 %v146, 16
    %v175 = vadd.s32 %v153, 16
    %v176 = vadd.s32 %v160, 16
    %v177 = vsel %vm169, %v173, %v139
    %v178 = vsel %vm170, %v174, %v146
    %v179 = vsel %vm171, %v175, %v153
    %v180 = vsel %vm172, %v176, %v160
    %vm181 = vcmp.ge.s32.totalorder %v177, 2
    %vm182 = vcmp.ge.s32.totalorder %v178, 2
    %vm183 = vcmp.ge.s32.totalorder %v179, 2
    %vm184 = vcmp.ge.s32.totalorder %v180, 2
    %v185 = vsel %vm181, 1, 0
    %v186 = vsel %vm182, 1, 0
    %v187 = vsel %vm183, 1, 0
    %v188 = vsel %vm184, 1, 0
    %vm189 = vcmp.eq.s32.totalorder %v185, 1
    %vm190 = vcmp.eq.s32.totalorder %v186, 1
    %vm191 = vcmp.eq.s32.totalorder %v187, 1
    %vm192 = vcmp.eq.s32.totalorder %v188, 1
    %vm193 = vmpackc.low %vm189, %vm189
    %vm194 = vmpackc.low %vm190, %vm190
    %vm195 = vmpackc.low %vm191, %vm191
    %vm196 = vmpackc.low %vm192, %vm192
    %v197 = vsel %vm193, 65537, 0
    %v198 = vsel %vm194, 65537, 0
    %v199 = vsel %vm195, 65537, 0
    %v200 = vsel %vm196, 65537, 0
    %v201 = vunpack.c.l.b16 %v197
    %v202 = vunpack.c.l.b16 %v198
    %v203 = vunpack.c.l.b16 %v199
    %v204 = vunpack.c.l.b16 %v200
    %v205 = vpack.c.b16 %v202, %v201
    %v206 = vpack.c.b16 %v204, %v203
    %v207 = vunpack.c.l.b16 %v205
    %v208 = vunpack.c.h.b16 %v205
    %v209 = vunpack.c.l.b16 0
    %v210 = vunpack.c.h.b16 0
    %vm211 = vcmp.ne.s32.totalorder %v207, %v209
    %vm212 = vcmp.ne.s32.totalorder %v208, %v210
    %vm213 = vmpackc.low %vm212, %vm211
    %v214 = vunpack.c.l.b16 %v206
    %v215 = vunpack.c.h.b16 %v206
    %v216 = vunpack.c.l.b16 0
    %v217 = vunpack.c.h.b16 0
    %vm218 = vcmp.ne.s32.totalorder %v214, %v216
    %vm219 = vcmp.ne.s32.totalorder %v215, %v217
    %vm220 = vmpackc.low %vm219, %vm218
    %v221 = vsel %vm213, %v120, 0
    %v222 = vsel %vm220, %v115, 0
    %v225 = vld [vmem:[#allocation2] sm:$0xf]
    %v226 = vld [vmem:[#allocation2 + $0x4] sm:$0xf]
    %v227 = vld [vmem:[#allocation2 + $0x8] sm:$0xf]
    %v228 = vld [vmem:[#allocation2 + $0xc] sm:$0xf]
    %v229 = vld [vmem:[#allocation2 + $0x10] sm:$0xf]
    %v230 = vld [vmem:[#allocation2 + $0x14] sm:$0xf]
    %v231 = vld [vmem:[#allocation2 + $0x18] sm:$0xf]
    %v232 = vld [vmem:[#allocation2 + $0x1c] sm:$0xf]
    %v233 = vld [vmem:[#allocation2 + $0x20] sm:$0xf]
    %v234 = vld [vmem:[#allocation2 + $0x24] sm:$0xf]
    %v235 = vld [vmem:[#allocation2 + $0x28] sm:$0xf]
    %v236 = vld [vmem:[#allocation2 + $0x2c] sm:$0xf]
    %v237 = vld [vmem:[#allocation2 + $0x30] sm:$0xf]
    %v238 = vld [vmem:[#allocation2 + $0x34] sm:$0xf]
    %v239 = vld [vmem:[#allocation2 + $0x38] sm:$0xf]
    %v240 = vld [vmem:[#allocation2 + $0x3c] sm:$0xf]
    %v241 = vld [vmem:[#allocation2 + $0x40] sm:$0xf]
    %v242 = vld [vmem:[#allocation2 + $0x44] sm:$0xf]
    %v243 = vld [vmem:[#allocation2 + $0x48] sm:$0xf]
    %v244 = vld [vmem:[#allocation2 + $0x4c] sm:$0xf]
    %v245 = vld [vmem:[#allocation2 + $0x50] sm:$0xf]
    %v246 = vld [vmem:[#allocation2 + $0x54] sm:$0xf]
    %v247 = vld [vmem:[#allocation2 + $0x58] sm:$0xf]
    %v248 = vld [vmem:[#allocation2 + $0x5c] sm:$0xf]
    %v249 = vld [vmem:[#allocation2 + $0x60] sm:$0xf]
    %v250 = vld [vmem:[#allocation2 + $0x64] sm:$0xf]
    %v251 = vld [vmem:[#allocation2 + $0x68] sm:$0xf]
    %v252 = vld [vmem:[#allocation2 + $0x6c] sm:$0xf]
    %v253 = vld [vmem:[#allocation2 + $0x70] sm:$0xf]
    %v254 = vld [vmem:[#allocation2 + $0x74] sm:$0xf]
    %v255 = vld [vmem:[#allocation2 + $0x78] sm:$0xf]
    %v256 = vld [vmem:[#allocation2 + $0x7c] sm:$0xf]
    %v257 = vld [vmem:[%s3] sm:$0x1]
    %v259 = vperm.slane %v257, 0
    %v293 = vunpack.c.l.b16 %v225
    %v294 = vunpack.c.l.b16 %v226
    %v295 = vunpack.c.l.b16 %v227
    %v296 = vunpack.c.l.b16 %v228
    %v297 = vunpack.c.l.b16 %v229
    %v298 = vunpack.c.l.b16 %v230
    %v299 = vunpack.c.l.b16 %v231
    %v300 = vunpack.c.l.b16 %v232
    %v301 = vunpack.c.l.b16 %v233
    %v302 = vunpack.c.l.b16 %v234
    %v303 = vunpack.c.l.b16 %v235
    %v304 = vunpack.c.l.b16 %v236
    %v305 = vunpack.c.l.b16 %v237
    %v306 = vunpack.c.l.b16 %v238
    %v307 = vunpack.c.l.b16 %v239
    %v308 = vunpack.c.l.b16 %v240
    %v309 = vunpack.c.l.b16 %v241
    %v310 = vunpack.c.l.b16 %v242
    %v311 = vunpack.c.l.b16 %v243
    %v312 = vunpack.c.l.b16 %v244
    %v313 = vunpack.c.l.b16 %v245
    %v314 = vunpack.c.l.b16 %v246
    %v315 = vunpack.c.l.b16 %v247
    %v316 = vunpack.c.l.b16 %v248
    %v317 = vunpack.c.l.b16 %v249
    %v318 = vunpack.c.l.b16 %v250
    %v319 = vunpack.c.l.b16 %v251
    %v320 = vunpack.c.l.b16 %v252
    %v321 = vunpack.c.l.b16 %v253
    %v322 = vunpack.c.l.b16 %v254
    %v323 = vunpack.c.l.b16 %v255
    %v324 = vunpack.c.l.b16 %v256
    %v325 = vpack.c.b16 %v294, %v293
    %v326 = vpack.c.b16 %v296, %v295
    %v327 = vpack.c.b16 %v298, %v297
    %v328 = vpack.c.b16 %v300, %v299
    %v329 = vpack.c.b16 %v302, %v301
    %v330 = vpack.c.b16 %v304, %v303
    %v331 = vpack.c.b16 %v306, %v305
    %v332 = vpack.c.b16 %v308, %v307
    %v333 = vpack.c.b16 %v310, %v309
    %v334 = vpack.c.b16 %v312, %v311
    %v335 = vpack.c.b16 %v314, %v313
    %v336 = vpack.c.b16 %v316, %v315
    %v337 = vpack.c.b16 %v318, %v317
    %v338 = vpack.c.b16 %v320, %v319
    %v339 = vpack.c.b16 %v322, %v321
    %v340 = vpack.c.b16 %v324, %v323
    %357 = vmatpush.bf16.msra.mxu0 %v332
    %358 = vmatpush.bf16.msra.mxu0 %v331
    %359 = vmatpush.bf16.msra.mxu0 %v330
    %360 = vmatpush.bf16.msra.mxu0 %v329
    %361 = vmatpush.bf16.msra.mxu0 %v328
    %362 = vmatpush.bf16.msra.mxu0 %v327
    %363 = vmatpush.bf16.msra.mxu0 %v326
    %364 = vmatpush.bf16.msra.mxu0 %v325
    %365 = vmatmul.bf16.gmra.mxu0 %v221
    %v366 = vpop.f32.mrf.mxu0
    %v367 = vadd.f32 %v259, %v366
    %v368 = vpop.f32.mrf.mxu0
    %v369 = vadd.f32 %v259, %v368
    %370 = vmatmul.bf16.gmra.mxu0 %v222
    %v371 = vpop.f32.mrf.mxu0
    %v372 = vadd.f32 %v259, %v371
    %v373 = vpop.f32.mrf.mxu0
    %v374 = vadd.f32 %v259, %v373
    %375 = vdwg.mxu0
    %376 = vmatpush.bf16.msra.mxu0 %v340
    %377 = vmatpush.bf16.msra.mxu0 %v339
    %378 = vmatpush.bf16.msra.mxu0 %v338
    %379 = vmatpush.bf16.msra.mxu0 %v337
    %380 = vmatpush.bf16.msra.mxu0 %v336
    %381 = vmatpush.bf16.msra.mxu0 %v335
    %382 = vmatpush.bf16.msra.mxu0 %v334
    %383 = vmatpush.bf16.msra.mxu0 %v333
    %384 = vmatmul.bf16.gmra.mxu0 %v110
    %v385 = vpop.f32.mrf.mxu0
    %v386 = vadd.f32 %v367, %v385
    %v387 = vpop.f32.mrf.mxu0
    %v388 = vadd.f32 %v369, %v387
    %389 = vmatmul.bf16.gmra.mxu0 %v111
    %v390 = vpop.f32.mrf.mxu0
    %v391 = vadd.f32 %v372, %v390
    %v392 = vpop.f32.mrf.mxu0
    %v393 = vadd.f32 %v374, %v392
    %394 = vdwg.mxu0
    %v395 = vmax.f32 %v386, -20.0
    %v396 = vmax.f32 %v388, -20.0
    %v397 = vmax.f32 %v391, -20.0
    %v398 = vmax.f32 %v393, -20.0
    %v399 = vmin.f32 %v395, 20.0
    %v400 = vmin.f32 %v396, 20.0
    %v401 = vmin.f32 %v397, 20.0
    %v402 = vmin.f32 %v398, 20.0
    %v403 = vsub.f32 0.0, %v399
    %v404 = vsub.f32 0.0, %v400
    %v405 = vsub.f32 0.0, %v401
    %v406 = vsub.f32 0.0, %v402
    %v407 = vmul.f32 %v403, 1.442695
    %v408 = vpow.pop %v407
    %v409 = vmul.f32 %v404, 1.442695
    %v410 = vpow.pop %v409
    %v411 = vmul.f32 %v405, 1.442695
    %v412 = vpow.pop %v411
    %v413 = vmul.f32 %v406, 1.442695
    %v414 = vpow.pop %v413
    %v415 = vmul.f32 %v408, %v408
    %v416 = vmul.f32 %v410, %v410
    %v417 = vmul.f32 %v412, %v412
    %v418 = vmul.f32 %v414, %v414
    %v419 = vsub.f32 1.0, %v415
    %v420 = vsub.f32 1.0, %v416
    %v421 = vsub.f32 1.0, %v417
    %v422 = vsub.f32 1.0, %v418
    %v423 = vadd.f32 %v415, 1.0
    %v424 = vadd.f32 %v416, 1.0
    %v425 = vadd.f32 %v417, 1.0
    %v426 = vadd.f32 %v418, 1.0
    %v427 = vadd.f32 %v408, 1.0
    %v428 = vadd.f32 %v410, 1.0
    %v429 = vadd.f32 %v412, 1.0
    %v430 = vadd.f32 %v414, 1.0
    %v431 = vmul.f32 %v423, %v427
    %v432 = vmul.f32 %v424, %v428
    %v433 = vmul.f32 %v425, %v429
    %v434 = vmul.f32 %v426, %v430
    %v435 = vrcp.pop %v431
    %v436 = vrcp.pop %v432
    %v437 = vrcp.pop %v433
    %v438 = vrcp.pop %v434
    %v439 = vmul.f32 %v419, %v435
    %v440 = vmul.f32 %v420, %v436
    %v441 = vmul.f32 %v421, %v437
    %v442 = vmul.f32 %v422, %v438
    %v443 = vpack.c.bf16 %v440, %v439
    %v444 = vpack.c.bf16 %v442, %v441
    %v445 = vld [vmem:[#allocation5] sm:$0xff]
    %v446 = vld [vmem:[#allocation5 + $0x8] sm:$0xff]
    %v447 = vld [vmem:[#allocation5 + $0x10] sm:$0xff]
    %v448 = vld [vmem:[#allocation5 + $0x18] sm:$0xff]
    %v449 = vld [vmem:[#allocation5 + $0x20] sm:$0xff]
    %v450 = vld [vmem:[#allocation5 + $0x28] sm:$0xff]
    %v451 = vld [vmem:[#allocation5 + $0x30] sm:$0xff]
    %v452 = vld [vmem:[#allocation5 + $0x38] sm:$0xff]
    %v453 = vld [vmem:[#allocation5 + $0x40] sm:$0xff]
    %v454 = vld [vmem:[#allocation5 + $0x48] sm:$0xff]
    %v455 = vld [vmem:[#allocation5 + $0x50] sm:$0xff]
    %v456 = vld [vmem:[#allocation5 + $0x58] sm:$0xff]
    %v457 = vld [vmem:[#allocation5 + $0x60] sm:$0xff]
    %v458 = vld [vmem:[#allocation5 + $0x68] sm:$0xff]
    %v459 = vld [vmem:[#allocation5 + $0x70] sm:$0xff]
    %v460 = vld [vmem:[#allocation5 + $0x78] sm:$0xff]
    %v461 = vld [vmem:[%s5] sm:$0x3]
    %v463 = vperm.slane %v461, 0
    %v464 = vperm.slane %v461, 1
    %v483 = vunpack.c.l.b16 %v445
    %v484 = vunpack.c.h.b16 %v445
    %v485 = vunpack.c.l.b16 %v446
    %v486 = vunpack.c.h.b16 %v446
    %v487 = vunpack.c.l.b16 %v447
    %v488 = vunpack.c.h.b16 %v447
    %v489 = vunpack.c.l.b16 %v448
    %v490 = vunpack.c.h.b16 %v448
    %v491 = vunpack.c.l.b16 %v449
    %v492 = vunpack.c.h.b16 %v449
    %v493 = vunpack.c.l.b16 %v450
    %v494 = vunpack.c.h.b16 %v450
    %v495 = vunpack.c.l.b16 %v451
    %v496 = vunpack.c.h.b16 %v451
    %v497 = vunpack.c.l.b16 %v452
    %v498 = vunpack.c.h.b16 %v452
    %v499 = vunpack.c.l.b16 %v453
    %v500 = vunpack.c.h.b16 %v453
    %v501 = vunpack.c.l.b16 %v454
    %v502 = vunpack.c.h.b16 %v454
    %v503 = vunpack.c.l.b16 %v455
    %v504 = vunpack.c.h.b16 %v455
    %v505 = vunpack.c.l.b16 %v456
    %v506 = vunpack.c.h.b16 %v456
    %v507 = vunpack.c.l.b16 %v457
    %v508 = vunpack.c.h.b16 %v457
    %v509 = vunpack.c.l.b16 %v458
    %v510 = vunpack.c.h.b16 %v458
    %v511 = vunpack.c.l.b16 %v459
    %v512 = vunpack.c.h.b16 %v459
    %v513 = vunpack.c.l.b16 %v460
    %v514 = vunpack.c.h.b16 %v460
    %v515 = vpack.c.b16 %v485, %v483
    %v516 = vpack.c.b16 %v486, %v484
    %v517 = vpack.c.b16 %v489, %v487
    %v518 = vpack.c.b16 %v490, %v488
    %v519 = vpack.c.b16 %v493, %v491
    %v520 = vpack.c.b16 %v494, %v492
    %v521 = vpack.c.b16 %v497, %v495
    %v522 = vpack.c.b16 %v498, %v496
    %v523 = vpack.c.b16 %v501, %v499
    %v524 = vpack.c.b16 %v502, %v500
    %v525 = vpack.c.b16 %v505, %v503
    %v526 = vpack.c.b16 %v506, %v504
    %v527 = vpack.c.b16 %v509, %v507
    %v528 = vpack.c.b16 %v510, %v508
    %v529 = vpack.c.b16 %v513, %v511
    %v530 = vpack.c.b16 %v514, %v512
    %547 = vmatpush.bf16.msra.mxu0 %v529
    %548 = vmatpush.bf16.msra.mxu0 %v527
    %549 = vmatpush.bf16.msra.mxu0 %v525
    %550 = vmatpush.bf16.msra.mxu0 %v523
    %551 = vmatpush.bf16.msra.mxu0 %v521
    %552 = vmatpush.bf16.msra.mxu0 %v519
    %553 = vmatpush.bf16.msra.mxu0 %v517
    %554 = vmatpush.bf16.msra.mxu0 %v515
    %555 = vmatmul.bf16.gmra.mxu0 %v443
    %v556 = vpop.f32.mrf.mxu0
    %v557 = vadd.f32 %v463, %v556
    %v558 = vpop.f32.mrf.mxu0
    %v559 = vadd.f32 %v463, %v558
    %560 = vmatmul.bf16.gmra.mxu0 %v444
    %v561 = vpop.f32.mrf.mxu0
    %v562 = vadd.f32 %v463, %v561
    %v563 = vpop.f32.mrf.mxu0
    %v564 = vadd.f32 %v463, %v563
    %565 = vdwg.mxu0
    %566 = vmatpush.bf16.msra.mxu0 %v530
    %567 = vmatpush.bf16.msra.mxu0 %v528
    %568 = vmatpush.bf16.msra.mxu0 %v526
    %569 = vmatpush.bf16.msra.mxu0 %v524
    %570 = vmatpush.bf16.msra.mxu0 %v522
    %571 = vmatpush.bf16.msra.mxu0 %v520
    %572 = vmatpush.bf16.msra.mxu0 %v518
    %573 = vmatpush.bf16.msra.mxu0 %v516
    %574 = vmatmul.bf16.gmra.mxu0 %v443
    %v575 = vpop.f32.mrf.mxu0
    %v576 = vadd.f32 %v464, %v575
    %v577 = vpop.f32.mrf.mxu0
    %v578 = vadd.f32 %v464, %v577
    %579 = vmatmul.bf16.gmra.mxu0 %v444
    %v580 = vpop.f32.mrf.mxu0
    %v581 = vadd.f32 %v464, %v580
    %v582 = vpop.f32.mrf.mxu0
    %v583 = vadd.f32 %v464, %v582
    %584 = vdwg.mxu0
    %v585 = vunpack.c.l.bf16 %v93
    %v586 = vunpack.c.l.bf16 %v94
    %v587 = vunpack.c.l.bf16 %v95
    %v588 = vunpack.c.l.bf16 %v96
    %v589 = vadd.f32 %v585, %v557
    %v590 = vadd.f32 %v586, %v559
    %v591 = vadd.f32 %v587, %v562
    %v592 = vadd.f32 %v588, %v564
    %593 = vst [vmem:[%s6] sm:$0xff] %v589
    %594 = vst [vmem:[%s6 + $0x8] sm:$0xff] %v590
    %595 = vst [vmem:[%s6 + $0x10] sm:$0xff] %v591
    %596 = vst [vmem:[%s6 + $0x18] sm:$0xff] %v592
    %597 = vst [vmem:[#allocation7] sm:$0xff] %v576
    %598 = vst [vmem:[#allocation7 + $0x8] sm:$0xff] %v578
    %599 = vst [vmem:[#allocation7 + $0x10] sm:$0xff] %v581
    %600 = vst [vmem:[#allocation7 + $0x18] sm:$0xff] %v583
    // Predicated region
    $region34: #{_lambda_.1} parent=1 // pred_check
      _
    $region35: #{_lambda_.1} parent=1 // pred_check_branch
      %602 = sbr.rel (0) target = $region37
    $region36: #{_lambda_.1} parent=1 // pred_region
      _
    $region37: #{_lambda_.1} parent=1 // pred_fallthru
      _
    // Predicated region
    $region38: #{_lambda_.1} parent=1 // pred_check
      _
    $region39: #{_lambda_.1} parent=1 // pred_check_branch
      %604 = sbr.rel (0) target = $region41
    $region40: #{_lambda_.1} parent=1 // pred_region
      %606 = vsyncadd [#allocation4], 0
      %s607 = sshll.u32 [#allocation7], 4
      %s608 = int_to_ptr.vmem [resolvable:$true] %s607
      %s609 = sshll.u32 %s7, 4
      %s610 = int_to_ptr.hbm [resolvable:$true] %s609
      %615 = dma.vmem_to_hbm [thread:$0]  %s608, 512, %s610, [#allocation4], 128, 128, 8
    $region41: #{_lambda_.1} parent=1 // pred_fallthru
      _
    // Predicated region
    $region42: #{_lambda_.1} parent=1 // pred_check
      _
    $region43: #{_lambda_.1} parent=1 // pred_check_branch
      %617 = sbr.rel (0) target = $region45
    $region44: #{_lambda_.1} parent=1 // pred_region
      _
    $region45: #{_lambda_.1} parent=1 // pred_fallthru
      _
    // Predicated region
    $region46: #{_lambda_.1} parent=1 // pred_check
      _
    $region47: #{_lambda_.1} parent=1 // pred_check_branch
      %619 = sbr.rel (0) target = $region49
    $region48: #{_lambda_.1} parent=1 // pred_region
      %621 = dma.done [#allocation4], 512
    $region49: #{_lambda_.1} parent=1 // pred_fallthru
      _
    %622 = vsyncpa [#allocation3], 1
    %623 = vsyncpa [#allocation6], 1
    %624 = vsyncpa [#allocation4], 1

</llo_original>
